<compile_context>
chip_gen: v6e
topology: v6e:2x2x1
jax: 0.10.0
libtpu: 0.0.40
codegen_flags: <defaults>
</compile_context>

<pallas_src>
from functools import partial

import jax
import jax.numpy as jnp
import numpy as np
from jax.experimental import pallas as pl
from jax.experimental.pallas import tpu as pltpu


def multicategorical_kernel(xT_ref, dT_ref, wT_ref, eT_ref, rT_ref, bT_ref, out_ref):
    """Fused weighted multi-head linear + Categorical log-softmax (feature-major).

    xT_ref:  [I,   TB]  float32  x^T batch tile (batch on lanes)
    dT_ref:  [N,   TB]  float32  dst_state^T batch tile
    wT_ref:  [N*O, I ]  float32  W_flat^T, wT[n*O+o, i] = W[n, i, o]
    eT_ref:  [N*O, N ]  float32  constant, eT[n*O+o, m] = (m == n)
    rT_ref:  [O,  N*O]  float32  constant, rT[o', n*O+o] = (o == o')
    bT_ref:  [O,   N ]  float32  stacked biases transposed, bT[o, n] = b[n, o]
    out_ref: [2*O, TB]  float32  rows [:O] raw logits^T, rows [O:] normalized logits^T
    """
    xT = xT_ref[...]                                                         # [I, TB]
    dT = dT_ref[...]                                                         # [N, TB]

    # xs^T[n*O+o, b] = sum_i W[n, i, o] * x[b, i]
    xsT = jnp.dot(wT_ref[...], xT, preferred_element_type=jnp.float32)       # [N*O, TB]
    # d_rep^T[n*O+o, b] = d[b, n]   (tiny K=N constant matmul, no sublane gathers)
    d_repT = jnp.dot(eT_ref[...], dT, preferred_element_type=jnp.float32)    # [N*O, TB]
    # acc^T[o, b] = sum_n d[b, n] * xs[b, n*O+o] + sum_n d[b, n] * bias[n, o]
    accT = jnp.dot(rT_ref[...], xsT * d_repT, preferred_element_type=jnp.float32)  # [O, TB]
    accT = accT + jnp.dot(bT_ref[...], dT, preferred_element_type=jnp.float32)     # [O, TB]

    # Categorical(logits=acc) normalization: logits = acc - logsumexp(acc) over O
    # (the O axis lives on sublanes here; per-column math is independent).
    m = jnp.max(accT, axis=0, keepdims=True)                                 # [1, TB]
    lse = m + jnp.log(jnp.sum(jnp.exp(accT - m), axis=0, keepdims=True))     # [1, TB]

    o_dim = accT.shape[0]
    # Two direct sublane-slice stores (aligned at the 8-sublane boundary).
    out_ref[:o_dim, :] = accT
    out_ref[o_dim:, :] = accT - lse


def _round_up(x, m):
    return ((x + m - 1) // m) * m


@partial(jax.jit, static_argnames=("block_b",))
def multicategorical_forward(x, dst_state, w_stacked, b_stacked, *, block_b=4096):
    """Returns (raw_logits, normalized_logits), both [B, O] float32.

    x:         [B, I]     float32
    dst_state: [B, N]     float32
    w_stacked: [N, I, O]  float32 (per-node weight, transposed from PyTorch's [O, I])
    b_stacked: [N, O]     float32
    """
    B, I = x.shape
    N, I2, O = w_stacked.shape
    assert I2 == I and dst_state.shape == (B, N) and b_stacked.shape == (N, O)

    x = x.astype(jnp.float32)
    dst_state = dst_state.astype(jnp.float32)

    # Feature-major (batch-on-lanes) operand layout.
    xT = x.T                                                                 # [I, B]
    dT = dst_state.T                                                         # [N, B]

    # Parameter / constant layout (constant-folded or trivially cheap under jit).
    wT = jnp.swapaxes(w_stacked.astype(jnp.float32), 1, 2).reshape(N * O, I)  # [N*O, I]
    eT = jnp.repeat(jnp.eye(N, dtype=jnp.float32), O, axis=0)                 # [N*O, N]
    rT = jnp.tile(jnp.eye(O, dtype=jnp.float32), (1, N))                      # [O, N*O]
    bT = b_stacked.astype(jnp.float32).T                                      # [O, N]

    # Batch tiling on the lane axis: whole batch for small B (single step, no padding);
    # otherwise 128-aligned tiles with >= 2 grid steps so v7x's 2 TensorCores both run.
    if B < 256:
        tb = B
    else:
        tb = max(128, min(block_b, _round_up(pl.cdiv(B, 2), 128)))
    grid = pl.cdiv(B, tb)   # ragged last block handled by Pallas; no jnp.pad copies

    out_t = pl.pallas_call(
        multicategorical_kernel,
        out_shape=jax.ShapeDtypeStruct((2 * O, B), jnp.float32),
        grid_spec=pltpu.PrefetchScalarGridSpec(
            num_scalar_prefetch=0,
            grid=(grid,),
            in_specs=[
                pl.BlockSpec((I, tb), lambda i: (0, i)),        # x^T batch tile
                pl.BlockSpec((N, tb), lambda i: (0, i)),        # dst_state^T batch tile
                pl.BlockSpec((N * O, I), lambda i: (0, 0)),     # W_flat^T (resident)
                pl.BlockSpec((N * O, N), lambda i: (0, 0)),     # E^T (resident)
                pl.BlockSpec((O, N * O), lambda i: (0, 0)),     # R^T (resident)
                pl.BlockSpec((O, N), lambda i: (0, 0)),         # biases^T (resident)
            ],
            out_specs=pl.BlockSpec((2 * O, tb), lambda i: (0, i)),
        ),
        compiler_params=pltpu.CompilerParams(
            dimension_semantics=("parallel",)),
    )(xT, dT, wT, eT, rT, bT)

    raw = out_t[:O, :].T                                                     # [B, O]
    logits = out_t[O:, :].T                                                  # [B, O]
    return raw, logits


def _reference(x, dst_state, w_stacked, b_stacked):
    xs = jnp.einsum("bi,nio->bno", x, w_stacked) + b_stacked[None]           # [B, N, O]
    raw = jnp.sum(xs * dst_state[:, :, None], axis=-2)                       # [B, O]
    logits = raw - jax.scipy.special.logsumexp(raw, axis=-1, keepdims=True)
    return raw, logits


def orthogonal_init(key, out_features, in_features, gain=0.01):
    """Deterministic stand-in for nn.init.orthogonal_(W, gain), W: [out, in]."""
    rows, cols = out_features, in_features
    flat = jax.random.normal(key, (max(rows, cols), min(rows, cols)), dtype=jnp.float32)
    q, r = jnp.linalg.qr(flat)
    q = q * jnp.sign(jnp.diagonal(r))[None, :]
    if rows < cols:
        q = q.T
    return gain * q[:rows, :cols]


if __name__ == "__main__":
    batch = 2
    num_inputs = 32
    num_outputs = 8
    num_node = 8   # num_node == num_outputs in the module's intended usage

    key = jax.random.PRNGKey(0)
    k_x, k_d, k_w, k_x2, k_d2 = jax.random.split(key, 5)

    # Parameters: num_node independent Linear(num_inputs, num_outputs), orthogonal init
    # (gain=0.01), zero bias; stored as [N, I, O] (transposed vs PyTorch's [O, I]).
    w_keys = jax.random.split(k_w, num_node)
    w_list = [orthogonal_init(w_keys[n], num_outputs, num_inputs, gain=0.01).T
              for n in range(num_node)]
    w_stacked = jnp.stack(w_list, axis=0)                                    # [N, I, O]
    b_stacked = jnp.zeros((num_node, num_outputs), dtype=jnp.float32)        # [N, O]

    # --- Test 1: tiny batch, one-hot dst_state (module's intended usage) ------------
    x = jax.random.normal(k_x, (batch, num_inputs), dtype=jnp.float32)
    dst_idx = jax.random.randint(k_d, (batch,), 0, num_node)
    dst_state = jax.nn.one_hot(dst_idx, num_node, dtype=jnp.float32)         # [batch, N]

    raw, logits = multicategorical_forward(x, dst_state, w_stacked, b_stacked)
    jax.block_until_ready(raw)
    jax.block_until_ready(logits)

    raw_ref, logits_ref = _reference(x, dst_state, w_stacked, b_stacked)
    assert np.allclose(np.asarray(raw), np.asarray(raw_ref), atol=2e-5, rtol=1e-4)
    assert np.allclose(np.asarray(logits), np.asarray(logits_ref), atol=2e-5, rtol=1e-4)

    # --- Test 2: gridded batch path (2 lane-aligned tiles + ragged last block) ------
    batch2 = 260
    x2 = jax.random.normal(k_x2, (batch2, num_inputs), dtype=jnp.float32)
    dst_state2 = jax.random.uniform(k_d2, (batch2, num_node), dtype=jnp.float32)

    raw2, logits2 = multicategorical_forward(x2, dst_state2, w_stacked, b_stacked)
    jax.block_until_ready(raw2)
    jax.block_until_ready(logits2)

    raw2_ref, logits2_ref = _reference(x2, dst_state2, w_stacked, b_stacked)
    assert np.allclose(np.asarray(raw2), np.asarray(raw2_ref), atol=2e-5, rtol=1e-4)
    assert np.allclose(np.asarray(logits2), np.asarray(logits2_ref), atol=2e-5, rtol=1e-4)

    print("KERNEL_OK")
</pallas_src>

<mosaic_0001>
module attributes {stable_mosaic.version = 11 : i64} {
  func.func @multicategorical_kernel(%arg0: i32, %arg1: memref<32x2xf32, #tpu.memory_space<vmem>>, %arg2: memref<8x2xf32, #tpu.memory_space<vmem>>, %arg3: memref<64x32xf32, #tpu.memory_space<vmem>>, %arg4: memref<64x8xf32, #tpu.memory_space<vmem>>, %arg5: memref<8x64xf32, #tpu.memory_space<vmem>>, %arg6: memref<8x8xf32, #tpu.memory_space<vmem>>, %arg7: memref<16x2xf32, #tpu.memory_space<vmem>>) attributes {dimension_semantics = [#tpu.dimension_semantics<parallel>], iteration_bounds = array<i64: 1>, scalar_prefetch = 0 : i64, scratch_operands = 0 : i64, tpu.core_type = #tpu.core_type<tc>, window_params = [{transform_indices = @transform_0, window_bounds = array<i64: 32, 2>}, {transform_indices = @transform_1, window_bounds = array<i64: 8, 2>}, {pipeline_mode = #tpu.pipeline_mode<synchronous>, transform_indices = @transform_2, window_bounds = array<i64: 64, 32>}, {pipeline_mode = #tpu.pipeline_mode<synchronous>, transform_indices = @transform_3, window_bounds = array<i64: 64, 8>}, {pipeline_mode = #tpu.pipeline_mode<synchronous>, transform_indices = @transform_4, window_bounds = array<i64: 8, 64>}, {pipeline_mode = #tpu.pipeline_mode<synchronous>, transform_indices = @transform_5, window_bounds = array<i64: 8, 8>}, {transform_indices = @transform_6, window_bounds = array<i64: 16, 2>}]} {
    %c0 = arith.constant 0 : index
    %c0_0 = arith.constant 0 : index
    %0 = vector.load %arg1[%c0, %c0_0] : memref<32x2xf32, #tpu.memory_space<vmem>>, vector<32x2xf32>
    %c0_1 = arith.constant 0 : index
    %c0_2 = arith.constant 0 : index
    %1 = vector.load %arg2[%c0_1, %c0_2] : memref<8x2xf32, #tpu.memory_space<vmem>>, vector<8x2xf32>
    %c0_3 = arith.constant 0 : index
    %c0_4 = arith.constant 0 : index
    %2 = vector.load %arg3[%c0_3, %c0_4] : memref<64x32xf32, #tpu.memory_space<vmem>>, vector<64x32xf32>
    %cst = arith.constant dense<0.000000e+00> : vector<64x2xf32>
    %3 = tpu.matmul %2, %0, %cst {dimension_numbers = #tpu.dot_dimension_numbers<[1], [0], [0], [1], [0, 0, 1, 1], [], []>} : vector<64x32xf32>, vector<32x2xf32>, vector<64x2xf32> -> vector<64x2xf32>
    %c0_5 = arith.constant 0 : index
    %c0_6 = arith.constant 0 : index
    %4 = vector.load %arg4[%c0_5, %c0_6] : memref<64x8xf32, #tpu.memory_space<vmem>>, vector<64x8xf32>
    %cst_7 = arith.constant dense<0.000000e+00> : vector<64x2xf32>
    %5 = tpu.matmul %4, %1, %cst_7 {dimension_numbers = #tpu.dot_dimension_numbers<[1], [0], [0], [1], [0, 0, 1, 1], [], []>} : vector<64x8xf32>, vector<8x2xf32>, vector<64x2xf32> -> vector<64x2xf32>
    %c0_8 = arith.constant 0 : index
    %c0_9 = arith.constant 0 : index
    %6 = vector.load %arg5[%c0_8, %c0_9] : memref<8x64xf32, #tpu.memory_space<vmem>>, vector<8x64xf32>
    %7 = arith.mulf %3, %5 : vector<64x2xf32>
    %cst_10 = arith.constant dense<0.000000e+00> : vector<8x2xf32>
    %8 = tpu.matmul %6, %7, %cst_10 {dimension_numbers = #tpu.dot_dimension_numbers<[1], [0], [0], [1], [0, 0, 1, 1], [], []>} : vector<8x64xf32>, vector<64x2xf32>, vector<8x2xf32> -> vector<8x2xf32>
    %c0_11 = arith.constant 0 : index
    %c0_12 = arith.constant 0 : index
    %9 = vector.load %arg6[%c0_11, %c0_12] : memref<8x8xf32, #tpu.memory_space<vmem>>, vector<8x8xf32>
    %cst_13 = arith.constant dense<0.000000e+00> : vector<8x2xf32>
    %10 = tpu.matmul %9, %1, %cst_13 {dimension_numbers = #tpu.dot_dimension_numbers<[1], [0], [0], [1], [0, 0, 1, 1], [], []>} : vector<8x8xf32>, vector<8x2xf32>, vector<8x2xf32> -> vector<8x2xf32>
    %11 = arith.addf %8, %10 : vector<8x2xf32>
    %cst_14 = arith.constant dense<0xFF800000> : vector<2xf32>
    %12 = vector.multi_reduction <maximumf>, %11, %cst_14 [0] : vector<8x2xf32> to vector<2xf32>
    %13 = vector.shape_cast %12 : vector<2xf32> to vector<1x2xf32>
    %14 = vector.broadcast %13 : vector<1x2xf32> to vector<8x2xf32>
    %15 = arith.subf %11, %14 : vector<8x2xf32>
    %16 = math.exp %15 : vector<8x2xf32>
    %cst_15 = arith.constant dense<0.000000e+00> : vector<2xf32>
    %17 = vector.multi_reduction <add>, %16, %cst_15 [0] : vector<8x2xf32> to vector<2xf32>
    %18 = vector.shape_cast %17 : vector<2xf32> to vector<1x2xf32>
    %19 = math.log %18 : vector<1x2xf32>
    %20 = arith.addf %13, %19 : vector<1x2xf32>
    %c0_16 = arith.constant 0 : index
    %c0_17 = arith.constant 0 : index
    %21 = vector.load %arg7[%c0_16, %c0_17] : memref<16x2xf32, #tpu.memory_space<vmem>>, vector<8x2xf32>
    tpu.vector_store %arg7[%c0_16, %c0_17], %11 {strides = array<i32>} : memref<16x2xf32, #tpu.memory_space<vmem>>, vector<8x2xf32>,
    %22 = vector.broadcast %20 : vector<1x2xf32> to vector<8x2xf32>
    %23 = arith.subf %11, %22 : vector<8x2xf32>
    %c8 = arith.constant 8 : index
    %c0_18 = arith.constant 0 : index
    %24 = vector.load %arg7[%c8, %c0_18] : memref<16x2xf32, #tpu.memory_space<vmem>>, vector<8x2xf32>
    tpu.vector_store %arg7[%c8, %c0_18], %23 {strides = array<i32>} : memref<16x2xf32, #tpu.memory_space<vmem>>, vector<8x2xf32>,
    return
  }
  func.func @transform_0(%arg0: i32) -> (i32, i32) {
    %c0_i32 = arith.constant 0 : i32
    %c0_i32_0 = arith.constant 0 : i32
    return %c0_i32, %arg0 : i32, i32
  }
  func.func @transform_1(%arg0: i32) -> (i32, i32) {
    %c0_i32 = arith.constant 0 : i32
    %c0_i32_0 = arith.constant 0 : i32
    return %c0_i32, %arg0 : i32, i32
  }
  func.func @transform_2(%arg0: i32) -> (i32, i32) {
    %c0_i32 = arith.constant 0 : i32
    %c0_i32_0 = arith.constant 0 : i32
    %c0_i32_1 = arith.constant 0 : i32
    return %c0_i32, %c0_i32_0 : i32, i32
  }
  func.func @transform_3(%arg0: i32) -> (i32, i32) {
    %c0_i32 = arith.constant 0 : i32
    %c0_i32_0 = arith.constant 0 : i32
    %c0_i32_1 = arith.constant 0 : i32
    return %c0_i32, %c0_i32_0 : i32, i32
  }
  func.func @transform_4(%arg0: i32) -> (i32, i32) {
    %c0_i32 = arith.constant 0 : i32
    %c0_i32_0 = arith.constant 0 : i32
    %c0_i32_1 = arith.constant 0 : i32
    return %c0_i32, %c0_i32_0 : i32, i32
  }
  func.func @transform_5(%arg0: i32) -> (i32, i32) {
    %c0_i32 = arith.constant 0 : i32
    %c0_i32_0 = arith.constant 0 : i32
    %c0_i32_1 = arith.constant 0 : i32
    return %c0_i32, %c0_i32_0 : i32, i32
  }
  func.func @transform_6(%arg0: i32) -> (i32, i32) {
    %c0_i32 = arith.constant 0 : i32
    %c0_i32_0 = arith.constant 0 : i32
    return %c0_i32, %arg0 : i32, i32
  }
}

</mosaic_0001>

<llo_original>
// kernel: tile.9
$region0: #{tile.9}
  %s0 = inlined_call_operand.vmem [shape: f32[8,8,8], index: 0, kind: input, shape index: {}]
  %s1 = inlined_call_operand.vmem [shape: f32[8,64], index: 1, kind: output, shape index: {}]
  %v2 = vld [vmem:[%s0] ss:$8 sm:$0xf]
  %v3 = vld [vmem:[%s0] ss:$8 sm:$0xf0]
  %vm4 = vcmask 1047556
  %v5 = vsel %vm4, %v3, %v2
  %vm6 = vcmask 64512
  %7 = vst.msk [vmem:[%s1] sm:$0xff] %vm6, %v5
  %s8 = scalar_lea.vmem %s0, 7
  %v9 = vld [vmem:[%s8] ss:$8 sm:$0xf]
  %s10 = scalar_lea.vmem %s0, 7
  %v11 = vld [vmem:[%s10] ss:$8 sm:$0xf0]
  %vm12 = vcmask 1047556
  %v13 = vsel %vm12, %v11, %v9
  %14 = vrot.lane.b32.xlu0 %v13, 56
  %v15 = vpop.permute.xlu0 %14
  %vm16 = vcmask 523712
  %17 = vst.msk [vmem:[%s1] sm:$0xff] %vm16, %v15
  %s18 = scalar_lea.vmem %s0, 6
  %v19 = vld [vmem:[%s18] ss:$8 sm:$0xf]
  %s20 = scalar_lea.vmem %s0, 6
  %v21 = vld [vmem:[%s20] ss:$8 sm:$0xf0]
  %vm22 = vcmask 1047556
  %v23 = vsel %vm22, %v21, %v19
  %24 = vrot.lane.b32.xlu0 %v23, 48
  %v25 = vpop.permute.xlu0 %24
  %vm26 = vcmask 458112
  %27 = vst.msk [vmem:[%s1] sm:$0xff] %vm26, %v25
  %s28 = scalar_lea.vmem %s0, 5
  %v29 = vld [vmem:[%s28] ss:$8 sm:$0xf]
  %s30 = scalar_lea.vmem %s0, 5
  %v31 = vld [vmem:[%s30] ss:$8 sm:$0xf0]
  %vm32 = vcmask 1047556
  %v33 = vsel %vm32, %v31, %v29
  %34 = vrot.lane.b32.xlu0 %v33, 40
  %v35 = vpop.permute.xlu0 %34
  %vm36 = vcmask 392512
  %37 = vst.msk [vmem:[%s1] sm:$0xff] %vm36, %v35
  %s38 = scalar_lea.vmem %s0, 4
  %v39 = vld [vmem:[%s38] ss:$8 sm:$0xf]
  %s40 = scalar_lea.vmem %s0, 4
  %v41 = vld [vmem:[%s40] ss:$8 sm:$0xf0]
  %vm42 = vcmask 1047556
  %v43 = vsel %vm42, %v41, %v39
  %44 = vrot.lane.b32.xlu0 %v43, 32
  %v45 = vpop.permute.xlu0 %44
  %vm46 = vcmask 326912
  %47 = vst.msk [vmem:[%s1] sm:$0xff] %vm46, %v45
  %s48 = scalar_lea.vmem %s0, 3
  %v49 = vld [vmem:[%s48] ss:$8 sm:$0xf]
  %s50 = scalar_lea.vmem %s0, 3
  %v51 = vld [vmem:[%s50] ss:$8 sm:$0xf0]
  %vm52 = vcmask 1047556
  %v53 = vsel %vm52, %v51, %v49
  %54 = vrot.lane.b32.xlu0 %v53, 24
  %v55 = vpop.permute.xlu0 %54
  %vm56 = vcmask 261312
  %57 = vst.msk [vmem:[%s1] sm:$0xff] %vm56, %v55
  %s58 = scalar_lea.vmem %s0, 2
  %v59 = vld [vmem:[%s58] ss:$8 sm:$0xf]
  %s60 = scalar_lea.vmem %s0, 2
  %v61 = vld [vmem:[%s60] ss:$8 sm:$0xf0]
  %vm62 = vcmask 1047556
  %v63 = vsel %vm62, %v61, %v59
  %64 = vrot.lane.b32.xlu0 %v63, 16
  %v65 = vpop.permute.xlu0 %64
  %vm66 = vcmask 195712
  %67 = vst.msk [vmem:[%s1] sm:$0xff] %vm66, %v65
  %s68 = scalar_lea.vmem %s0, 1
  %v69 = vld [vmem:[%s68] ss:$8 sm:$0xf]
  %s70 = scalar_lea.vmem %s0, 1
  %v71 = vld [vmem:[%s70] ss:$8 sm:$0xf0]
  %vm72 = vcmask 1047556
  %v73 = vsel %vm72, %v71, %v69
  %74 = vrot.lane.b32.xlu0 %v73, 8
  %v75 = vpop.permute.xlu0 %74
  %vm76 = vcmask 130112
  %77 = vst.msk [vmem:[%s1] sm:$0xff] %vm76, %v75

// kernel: multicategorical_forward.1
$region0: #{multicategorical_forward.1}
  #allocation0 [shape = 'u32[]', space=smem, size = 0x4, offset = 0x4, fixed_abs, tag = 'smem constant byte address 0x4 - core index']
  #allocation1 [shape = 'u32[144,128]{1,0:T(1,128)}', space=vmem, size = 0x12000, scoped, tag = 'internal scratch']
  %s0 = inlined_call_operand.vmem [shape: f32[32,2], index: 0, kind: input, shape index: {}]
  %s1 = inlined_call_operand.vmem [shape: f32[8,2], index: 1, kind: input, shape index: {}]
  %s2 = inlined_call_operand.vmem [shape: f32[64,32], index: 2, kind: input, shape index: {}]
  %s3 = inlined_call_operand.vmem [shape: f32[64,8], index: 3, kind: input, shape index: {}]
  %s4 = inlined_call_operand.vmem [shape: f32[8,64], index: 4, kind: input, shape index: {}]
  %s5 = inlined_call_operand.vmem [shape: f32[8,8], index: 5, kind: input, shape index: {}]
  %s6 = inlined_call_operand.vmem [shape: f32[16,2], index: 6, kind: output, shape index: {}]
  %s7 = sld [smem:[#allocation0]]
  $region34: #{multicategorical_forward.1} parent=0
    _
  %s9 = ssub.s32 1, %s7
  %s10 = scalar_select 0, %s9, %s7
  // Predicated region
  $region2: #{multicategorical_forward.1} parent=0 // pred_check
    _
  $region3: #{multicategorical_forward.1} parent=0 // pred_check_branch
    %12 = sbr.rel (0) target = $region5
  $region4: #{multicategorical_forward.1} parent=0 // pred_region
    _
  $region5: #{multicategorical_forward.1} parent=0 // pred_fallthru
    _
  // Predicated region
  $region6: #{multicategorical_forward.1} parent=0 // pred_check
    _
  $region7: #{multicategorical_forward.1} parent=0 // pred_check_branch
    %14 = sbr.rel (0) target = $region9
  $region8: #{multicategorical_forward.1} parent=0 // pred_region
    _
  $region9: #{multicategorical_forward.1} parent=0 // pred_fallthru
    _
  // Predicated region
  $region10: #{multicategorical_forward.1} parent=0 // pred_check
    _
  $region11: #{multicategorical_forward.1} parent=0 // pred_check_branch
    %16 = sbr.rel (0) target = $region13
  $region12: #{multicategorical_forward.1} parent=0 // pred_region
    _
  $region13: #{multicategorical_forward.1} parent=0 // pred_fallthru
    _
  // Predicated region
  $region14: #{multicategorical_forward.1} parent=0 // pred_check
    _
  $region15: #{multicategorical_forward.1} parent=0 // pred_check_branch
    %18 = sbr.rel (0) target = $region17
  $region16: #{multicategorical_forward.1} parent=0 // pred_region
    _
  $region17: #{multicategorical_forward.1} parent=0 // pred_fallthru
    _
  // Predicated region
  $region18: #{multicategorical_forward.1} parent=0 // pred_check
    _
  $region19: #{multicategorical_forward.1} parent=0 // pred_check_branch
    %20 = sbr.rel (0) target = $region21
  $region20: #{multicategorical_forward.1} parent=0 // pred_region
    _
  $region21: #{multicategorical_forward.1} parent=0 // pred_fallthru
    _
  // Predicated region
  $region22: #{multicategorical_forward.1} parent=0 // pred_check
    _
  $region23: #{multicategorical_forward.1} parent=0 // pred_check_branch
    %22 = sbr.rel (0) target = $region25
  $region24: #{multicategorical_forward.1} parent=0 // pred_region
    _
  $region25: #{multicategorical_forward.1} parent=0 // pred_fallthru
    _
  %v23 = vld [vmem:[%s0] sm:$0xff]
  %v24 = vld [vmem:[%s0 + $0x8] sm:$0xff]
  %v25 = vld [vmem:[%s0 + $0x10] sm:$0xff]
  %v26 = vld [vmem:[%s0 + $0x18] sm:$0xff]
  %v27 = vld [vmem:[%s1] sm:$0xff]
  %v28 = vld [vmem:[%s2] sm:$0xff]
  %v29 = vld [vmem:[%s2 + $0x8] sm:$0xff]
  %v30 = vld [vmem:[%s2 + $0x10] sm:$0xff]
  %v31 = vld [vmem:[%s2 + $0x18] sm:$0xff]
  %v32 = vld [vmem:[%s2 + $0x20] sm:$0xff]
  %v33 = vld [vmem:[%s2 + $0x28] sm:$0xff]
  %v34 = vld [vmem:[%s2 + $0x30] sm:$0xff]
  %v35 = vld [vmem:[%s2 + $0x38] sm:$0xff]
  %vm36 = vcmask 261120
  %v38 = vsel %vm36, %v28, 0
  %v41 = vsel %vm36, %v29, 0
  %v44 = vsel %vm36, %v30, 0
  %v47 = vsel %vm36, %v31, 0
  %v50 = vsel %vm36, %v32, 0
  %v53 = vsel %vm36, %v33, 0
  %v56 = vsel %vm36, %v34, 0
  %v59 = vsel %vm36, %v35, 0
  %61 = vmatprep.subr.mxu0 0.0
  %62 = vmatpush1.msra.mxu0 0.0
  %63 = vmatprep.subr.mxu0 0.0
  %64 = vmatpush1.msra.mxu0 0.0
  %65 = vmatprep.subr.mxu0 0.0
  %66 = vmatpush1.msra.mxu0 0.0
  %67 = vmatprep.subr.mxu0 0.0
  %68 = vmatpush1.msra.mxu0 0.0
  %69 = vmatprep.subr.mxu0 0.0
  %70 = vmatpush1.msra.mxu0 0.0
  %71 = vmatprep.subr.mxu0 0.0
  %72 = vmatpush1.msra.mxu0 0.0
  %73 = vmatprep.subr.mxu0 0.0
  %74 = vmatpush1.msra.mxu0 0.0
  %75 = vmatprep.subr.mxu0 0.0
  %76 = vmatpush1.msra.mxu0 0.0
  %77 = vmatprep.subr.mxu0 0.0
  %78 = vmatpush1.msra.mxu0 0.0
  %79 = vmatprep.subr.mxu0 0.0
  %80 = vmatpush1.msra.mxu0 0.0
  %81 = vmatprep.subr.mxu0 0.0
  %82 = vmatpush1.msra.mxu0 0.0
  %83 = vmatprep.subr.mxu0 0.0
  %84 = vmatpush1.msra.mxu0 0.0
  %85 = vmatprep.subr.mxu0 0.0
  %86 = vmatpush1.msra.mxu0 %v26
  %87 = vmatprep.subr.mxu0 0.0
  %88 = vmatpush1.msra.mxu0 %v25
  %89 = vmatprep.subr.mxu0 0.0
  %90 = vmatpush1.msra.mxu0 %v24
  %91 = vmatprep.subr.mxu0 0.0
  %92 = vmatpush1.msra.mxu0 %v23
  %93 = vmatprep.subr.mxu0 0.0
  %94 = vmatpush2.msra.mxu0 0.0
  %95 = vmatprep.subr.mxu0 0.0
  %96 = vmatpush2.msra.mxu0 0.0
  %97 = vmatprep.subr.mxu0 0.0
  %98 = vmatpush2.msra.mxu0 0.0
  %99 = vmatprep.subr.mxu0 0.0
  %100 = vmatpush2.msra.mxu0 0.0
  %101 = vmatprep.subr.mxu0 0.0
  %102 = vmatpush2.msra.mxu0 0.0
  %103 = vmatprep.subr.mxu0 0.0
  %104 = vmatpush2.msra.mxu0 0.0
  %105 = vmatprep.subr.mxu0 0.0
  %106 = vmatpush2.msra.mxu0 0.0
  %107 = vmatprep.subr.mxu0 0.0
  %108 = vmatpush2.msra.mxu0 0.0
  %109 = vmatprep.subr.mxu0 0.0
  %110 = vmatpush2.msra.mxu0 0.0
  %111 = vmatprep.subr.mxu0 0.0
  %112 = vmatpush2.msra.mxu0 0.0
  %113 = vmatprep.subr.mxu0 0.0
  %114 = vmatpush2.msra.mxu0 0.0
  %115 = vmatprep.subr.mxu0 0.0
  %116 = vmatpush2.msra.mxu0 0.0
  %117 = vmatprep.subr.mxu0 0.0
  %118 = vmatpush2.msra.mxu0 0.0
  %119 = vmatprep.subr.mxu0 0.0
  %120 = vmatpush2.msra.mxu0 0.0
  %121 = vmatprep.subr.mxu0 0.0
  %122 = vmatpush2.msra.mxu0 0.0
  %123 = vmatprep.subr.mxu0 0.0
  %124 = vmatpush2.msra.mxu0 0.0
  %125 = vmatprep.mubr.f32.mxu0 0.0
  %126 = vmatmul.mubr.f32.gmra.mxu0 %v38
  %v127 = vpop.f32.mrf.mxu0
  %v128 = vadd.f32 0.0, %v127
  %v129 = vpop.f32.mrf.mxu0
  %130 = vmatprep.mubr.f32.mxu0 0.0
  %131 = vmatmul.mubr.f32.gmra.mxu0 %v41
  %v132 = vpop.f32.mrf.mxu0
  %v133 = vadd.f32 0.0, %v132
  %v134 = vpop.f32.mrf.mxu0
  %135 = vmatprep.mubr.f32.mxu0 0.0
  %136 = vmatmul.mubr.f32.gmra.mxu0 %v44
  %v137 = vpop.f32.mrf.mxu0
  %v138 = vadd.f32 0.0, %v137
  %v139 = vpop.f32.mrf.mxu0
  %140 = vmatprep.mubr.f32.mxu0 0.0
  %141 = vmatmul.mubr.f32.gmra.mxu0 %v47
  %v142 = vpop.f32.mrf.mxu0
  %v143 = vadd.f32 0.0, %v142
  %v144 = vpop.f32.mrf.mxu0
  %145 = vmatprep.mubr.f32.mxu0 0.0
  %146 = vmatmul.mubr.f32.gmra.mxu0 %v50
  %v147 = vpop.f32.mrf.mxu0
  %v148 = vadd.f32 0.0, %v147
  %v149 = vpop.f32.mrf.mxu0
  %150 = vmatprep.mubr.f32.mxu0 0.0
  %151 = vmatmul.mubr.f32.gmra.mxu0 %v53
  %v152 = vpop.f32.mrf.mxu0
  %v153 = vadd.f32 0.0, %v152
  %v154 = vpop.f32.mrf.mxu0
  %155 = vmatprep.mubr.f32.mxu0 0.0
  %156 = vmatmul.mubr.f32.gmra.mxu0 %v56
  %v157 = vpop.f32.mrf.mxu0
  %v158 = vadd.f32 0.0, %v157
  %v159 = vpop.f32.mrf.mxu0
  %160 = vmatprep.mubr.f32.mxu0 0.0
  %161 = vmatmul.mubr.f32.gmra.mxu0 %v59
  %v162 = vpop.f32.mrf.mxu0
  %v163 = vadd.f32 0.0, %v162
  %v164 = vpop.f32.mrf.mxu0
  %165 = vdwg.mxu0
  %v166 = vld [vmem:[%s3] sm:$0xff]
  %v167 = vld [vmem:[%s3 + $0x8] sm:$0xff]
  %v168 = vld [vmem:[%s3 + $0x10] sm:$0xff]
  %v169 = vld [vmem:[%s3 + $0x18] sm:$0xff]
  %v170 = vld [vmem:[%s3 + $0x20] sm:$0xff]
  %v171 = vld [vmem:[%s3 + $0x28] sm:$0xff]
  %v172 = vld [vmem:[%s3 + $0x30] sm:$0xff]
  %v173 = vld [vmem:[%s3 + $0x38] sm:$0xff]
  %vm174 = vcmask 64512
  %v176 = vsel %vm174, %v166, 0
  %v179 = vsel %vm174, %v167, 0
  %v182 = vsel %vm174, %v168, 0
  %v185 = vsel %vm174, %v169, 0
  %v188 = vsel %vm174, %v170, 0
  %v191 = vsel %vm174, %v171, 0
  %v194 = vsel %vm174, %v172, 0
  %v197 = vsel %vm174, %v173, 0
  %199 = vmatprep.subr.mxu0 0.0
  %200 = vmatpush1.msra.mxu0 0.0
  %201 = vmatprep.subr.mxu0 0.0
  %202 = vmatpush1.msra.mxu0 0.0
  %203 = vmatprep.subr.mxu0 0.0
  %204 = vmatpush1.msra.mxu0 0.0
  %205 = vmatprep.subr.mxu0 0.0
  %206 = vmatpush1.msra.mxu0 0.0
  %207 = vmatprep.subr.mxu0 0.0
  %208 = vmatpush1.msra.mxu0 0.0
  %209 = vmatprep.subr.mxu0 0.0
  %210 = vmatpush1.msra.mxu0 0.0
  %211 = vmatprep.subr.mxu0 0.0
  %212 = vmatpush1.msra.mxu0 0.0
  %213 = vmatprep.subr.mxu0 0.0
  %214 = vmatpush1.msra.mxu0 0.0
  %215 = vmatprep.subr.mxu0 0.0
  %216 = vmatpush1.msra.mxu0 0.0
  %217 = vmatprep.subr.mxu0 0.0
  %218 = vmatpush1.msra.mxu0 0.0
  %219 = vmatprep.subr.mxu0 0.0
  %220 = vmatpush1.msra.mxu0 0.0
  %221 = vmatprep.subr.mxu0 0.0
  %222 = vmatpush1.msra.mxu0 0.0
  %223 = vmatprep.subr.mxu0 0.0
  %224 = vmatpush1.msra.mxu0 0.0
  %225 = vmatprep.subr.mxu0 0.0
  %226 = vmatpush1.msra.mxu0 0.0
  %227 = vmatprep.subr.mxu0 0.0
  %228 = vmatpush1.msra.mxu0 0.0
  %229 = vmatprep.subr.mxu0 0.0
  %230 = vmatpush1.msra.mxu0 %v27
  %231 = vmatprep.subr.mxu0 0.0
  %232 = vmatpush2.msra.mxu0 0.0
  %233 = vmatprep.subr.mxu0 0.0
  %234 = vmatpush2.msra.mxu0 0.0
  %235 = vmatprep.subr.mxu0 0.0
  %236 = vmatpush2.msra.mxu0 0.0
  %237 = vmatprep.subr.mxu0 0.0
  %238 = vmatpush2.msra.mxu0 0.0
  %239 = vmatprep.subr.mxu0 0.0
  %240 = vmatpush2.msra.mxu0 0.0
  %241 = vmatprep.subr.mxu0 0.0
  %242 = vmatpush2.msra.mxu0 0.0
  %243 = vmatprep.subr.mxu0 0.0
  %244 = vmatpush2.msra.mxu0 0.0
  %245 = vmatprep.subr.mxu0 0.0
  %246 = vmatpush2.msra.mxu0 0.0
  %247 = vmatprep.subr.mxu0 0.0
  %248 = vmatpush2.msra.mxu0 0.0
  %249 = vmatprep.subr.mxu0 0.0
  %250 = vmatpush2.msra.mxu0 0.0
  %251 = vmatprep.subr.mxu0 0.0
  %252 = vmatpush2.msra.mxu0 0.0
  %253 = vmatprep.subr.mxu0 0.0
  %254 = vmatpush2.msra.mxu0 0.0
  %255 = vmatprep.subr.mxu0 0.0
  %256 = vmatpush2.msra.mxu0 0.0
  %257 = vmatprep.subr.mxu0 0.0
  %258 = vmatpush2.msra.mxu0 0.0
  %259 = vmatprep.subr.mxu0 0.0
  %260 = vmatpush2.msra.mxu0 0.0
  %261 = vmatprep.subr.mxu0 0.0
  %262 = vmatpush2.msra.mxu0 0.0
  %263 = vmatprep.mubr.f32.mxu0 0.0
  %264 = vmatmul.mubr.f32.gmra.mxu0 %v176
  %v265 = vpop.f32.mrf.mxu0
  %v266 = vadd.f32 0.0, %v265
  %v267 = vpop.f32.mrf.mxu0
  %268 = vmatprep.mubr.f32.mxu0 0.0
  %269 = vmatmul.mubr.f32.gmra.mxu0 %v179
  %v270 = vpop.f32.mrf.mxu0
  %v271 = vadd.f32 0.0, %v270
  %v272 = vpop.f32.mrf.mxu0
  %273 = vmatprep.mubr.f32.mxu0 0.0
  %274 = vmatmul.mubr.f32.gmra.mxu0 %v182
  %v275 = vpop.f32.mrf.mxu0
  %v276 = vadd.f32 0.0, %v275
  %v277 = vpop.f32.mrf.mxu0
  %278 = vmatprep.mubr.f32.mxu0 0.0
  %279 = vmatmul.mubr.f32.gmra.mxu0 %v185
  %v280 = vpop.f32.mrf.mxu0
  %v281 = vadd.f32 0.0, %v280
  %v282 = vpop.f32.mrf.mxu0
  %283 = vmatprep.mubr.f32.mxu0 0.0
  %284 = vmatmul.mubr.f32.gmra.mxu0 %v188
  %v285 = vpop.f32.mrf.mxu0
  %v286 = vadd.f32 0.0, %v285
  %v287 = vpop.f32.mrf.mxu0
  %288 = vmatprep.mubr.f32.mxu0 0.0
  %289 = vmatmul.mubr.f32.gmra.mxu0 %v191
  %v290 = vpop.f32.mrf.mxu0
  %v291 = vadd.f32 0.0, %v290
  %v292 = vpop.f32.mrf.mxu0
  %293 = vmatprep.mubr.f32.mxu0 0.0
  %294 = vmatmul.mubr.f32.gmra.mxu0 %v194
  %v295 = vpop.f32.mrf.mxu0
  %v296 = vadd.f32 0.0, %v295
  %v297 = vpop.f32.mrf.mxu0
  %298 = vmatprep.mubr.f32.mxu0 0.0
  %299 = vmatmul.mubr.f32.gmra.mxu0 %v197
  %v300 = vpop.f32.mrf.mxu0
  %v301 = vadd.f32 0.0, %v300
  %v302 = vpop.f32.mrf.mxu0
  %303 = vdwg.mxu0
  %v304 = vld [vmem:[%s4] sm:$0xff]
  %v305 = vmul.f32 %v128, %v266
  %v306 = vmul.f32 %v133, %v271
  %v307 = vmul.f32 %v138, %v276
  %v308 = vmul.f32 %v143, %v281
  %v309 = vmul.f32 %v148, %v286
  %v310 = vmul.f32 %v153, %v291
  %v311 = vmul.f32 %v158, %v296
  %v312 = vmul.f32 %v163, %v301
  %v313 = vld [vmem:[%s5] sm:$0xff]
  %v315 = vsel %vm174, %v313, 0
  %317 = vmatprep.subr.mxu0 0.0
  %318 = vmatpush1.msra.mxu0 0.0
  %319 = vmatprep.subr.mxu0 0.0
  %320 = vmatpush1.msra.mxu0 0.0
  %321 = vmatprep.subr.mxu0 0.0
  %322 = vmatpush1.msra.mxu0 0.0
  %323 = vmatprep.subr.mxu0 0.0
  %324 = vmatpush1.msra.mxu0 0.0
  %325 = vmatprep.subr.mxu0 0.0
  %326 = vmatpush1.msra.mxu0 0.0
  %327 = vmatprep.subr.mxu0 0.0
  %328 = vmatpush1.msra.mxu0 0.0
  %329 = vmatprep.subr.mxu0 0.0
  %330 = vmatpush1.msra.mxu0 0.0
  %331 = vmatprep.subr.mxu0 0.0
  %332 = vmatpush1.msra.mxu0 0.0
  %333 = vmatprep.subr.mxu0 0.0
  %334 = vmatpush1.msra.mxu0 0.0
  %335 = vmatprep.subr.mxu0 0.0
  %336 = vmatpush1.msra.mxu0 0.0
  %337 = vmatprep.subr.mxu0 0.0
  %338 = vmatpush1.msra.mxu0 0.0
  %339 = vmatprep.subr.mxu0 0.0
  %340 = vmatpush1.msra.mxu0 0.0
  %341 = vmatprep.subr.mxu0 0.0
  %342 = vmatpush1.msra.mxu0 0.0
  %343 = vmatprep.subr.mxu0 0.0
  %344 = vmatpush1.msra.mxu0 0.0
  %345 = vmatprep.subr.mxu0 0.0
  %346 = vmatpush1.msra.mxu0 0.0
  %347 = vmatprep.subr.mxu0 0.0
  %348 = vmatpush1.msra.mxu0 %v27
  %349 = vmatprep.subr.mxu0 0.0
  %350 = vmatpush2.msra.mxu0 0.0
  %351 = vmatprep.subr.mxu0 0.0
  %352 = vmatpush2.msra.mxu0 0.0
  %353 = vmatprep.subr.mxu0 0.0
  %354 = vmatpush2.msra.mxu0 0.0
  %355 = vmatprep.subr.mxu0 0.0
  %356 = vmatpush2.msra.mxu0 0.0
  %357 = vmatprep.subr.mxu0 0.0
  %358 = vmatpush2.msra.mxu0 0.0
  %359 = vmatprep.subr.mxu0 0.0
  %360 = vmatpush2.msra.mxu0 0.0
  %361 = vmatprep.subr.mxu0 0.0
  %362 = vmatpush2.msra.mxu0 0.0
  %363 = vmatprep.subr.mxu0 0.0
  %364 = vmatpush2.msra.mxu0 0.0
  %365 = vmatprep.subr.mxu0 0.0
  %366 = vmatpush2.msra.mxu0 0.0
  %367 = vmatprep.subr.mxu0 0.0
  %368 = vmatpush2.msra.mxu0 0.0
  %369 = vmatprep.subr.mxu0 0.0
  %370 = vmatpush2.msra.mxu0 0.0
  %371 = vmatprep.subr.mxu0 0.0
  %372 = vmatpush2.msra.mxu0 0.0
  %373 = vmatprep.subr.mxu0 0.0
  %374 = vmatpush2.msra.mxu0 0.0
  %375 = vmatprep.subr.mxu0 0.0
  %376 = vmatpush2.msra.mxu0 0.0
  %377 = vmatprep.subr.mxu0 0.0
  %378 = vmatpush2.msra.mxu0 0.0
  %379 = vmatprep.subr.mxu0 0.0
  %380 = vmatpush2.msra.mxu0 0.0
  %381 = vmatprep.mubr.f32.mxu0 0.0
  %382 = vmatmul.mubr.f32.gmra.mxu0 %v315
  %v383 = vpop.f32.mrf.mxu0
  %v384 = vadd.f32 0.0, %v383
  %v385 = vpop.f32.mrf.mxu0
  %386 = vdwg.mxu0
  %vm387 = vcmask 523264
  %v389 = vsel %vm387, %v304, 0
  %391 = vmatprep.subr.mxu0 0.0
  %392 = vmatpush1.msra.mxu0 0.0
  %393 = vmatprep.subr.mxu0 0.0
  %394 = vmatpush1.msra.mxu0 0.0
  %395 = vmatprep.subr.mxu0 0.0
  %396 = vmatpush1.msra.mxu0 0.0
  %397 = vmatprep.subr.mxu0 0.0
  %398 = vmatpush1.msra.mxu0 0.0
  %399 = vmatprep.subr.mxu0 0.0
  %400 = vmatpush1.msra.mxu0 0.0
  %401 = vmatprep.subr.mxu0 0.0
  %402 = vmatpush1.msra.mxu0 0.0
  %403 = vmatprep.subr.mxu0 0.0
  %404 = vmatpush1.msra.mxu0 0.0
  %405 = vmatprep.subr.mxu0 0.0
  %406 = vmatpush1.msra.mxu0 0.0
  %407 = vmatprep.subr.mxu0 0.0
  %408 = vmatpush1.msra.mxu0 %v312
  %409 = vmatprep.subr.mxu0 0.0
  %410 = vmatpush1.msra.mxu0 %v311
  %411 = vmatprep.subr.mxu0 0.0
  %412 = vmatpush1.msra.mxu0 %v310
  %413 = vmatprep.subr.mxu0 0.0
  %414 = vmatpush1.msra.mxu0 %v309
  %415 = vmatprep.subr.mxu0 0.0
  %416 = vmatpush1.msra.mxu0 %v308
  %417 = vmatprep.subr.mxu0 0.0
  %418 = vmatpush1.msra.mxu0 %v307
  %419 = vmatprep.subr.mxu0 0.0
  %420 = vmatpush1.msra.mxu0 %v306
  %421 = vmatprep.subr.mxu0 0.0
  %422 = vmatpush1.msra.mxu0 %v305
  %423 = vmatprep.subr.mxu0 0.0
  %424 = vmatpush2.msra.mxu0 0.0
  %425 = vmatprep.subr.mxu0 0.0
  %426 = vmatpush2.msra.mxu0 0.0
  %427 = vmatprep.subr.mxu0 0.0
  %428 = vmatpush2.msra.mxu0 0.0
  %429 = vmatprep.subr.mxu0 0.0
  %430 = vmatpush2.msra.mxu0 0.0
  %431 = vmatprep.subr.mxu0 0.0
  %432 = vmatpush2.msra.mxu0 0.0
  %433 = vmatprep.subr.mxu0 0.0
  %434 = vmatpush2.msra.mxu0 0.0
  %435 = vmatprep.subr.mxu0 0.0
  %436 = vmatpush2.msra.mxu0 0.0
  %437 = vmatprep.subr.mxu0 0.0
  %438 = vmatpush2.msra.mxu0 0.0
  %439 = vmatprep.subr.mxu0 0.0
  %440 = vmatpush2.msra.mxu0 0.0
  %441 = vmatprep.subr.mxu0 0.0
  %442 = vmatpush2.msra.mxu0 0.0
  %443 = vmatprep.subr.mxu0 0.0
  %444 = vmatpush2.msra.mxu0 0.0
  %445 = vmatprep.subr.mxu0 0.0
  %446 = vmatpush2.msra.mxu0 0.0
  %447 = vmatprep.subr.mxu0 0.0
  %448 = vmatpush2.msra.mxu0 0.0
  %449 = vmatprep.subr.mxu0 0.0
  %450 = vmatpush2.msra.mxu0 0.0
  %451 = vmatprep.subr.mxu0 0.0
  %452 = vmatpush2.msra.mxu0 0.0
  %453 = vmatprep.subr.mxu0 0.0
  %454 = vmatpush2.msra.mxu0 0.0
  %455 = vmatprep.mubr.f32.mxu0 0.0
  %456 = vmatmul.mubr.f32.gmra.mxu0 %v389
  %v457 = vpop.f32.mrf.mxu0
  %v458 = vadd.f32 %v384, %v457
  %v459 = vpop.f32.mrf.mxu0
  %460 = vdwg.mxu0
  %vm461 = vcmask 15360
  %v462 = vsel %vm461, %v458, -inf
  %v463 = vrot.slane %v462, 4
  %v464 = vmax.f32 %v462, %v463
  %v465 = vrot.slane %v464, 2
  %v466 = vmax.f32 %v464, %v465
  %v467 = vrot.slane %v466, 1
  %v468 = vmax.f32 %v466, %v467
  %v469 = vsub.f32 %v458, %v468
  %v470 = vmul.f32 %v469, 1.442695
  %v471 = vpow.pop %v470
  %v472 = vsel %vm461, %v471, 0.0
  %v473 = vrot.slane %v472, 4
  %v474 = vadd.f32 %v472, %v473
  %v475 = vrot.slane %v474, 2
  %v476 = vadd.f32 %v474, %v475
  %v477 = vrot.slane %v476, 1
  %v478 = vadd.f32 %v476, %v477
  %v479 = vlog2.pop %v478
  %v480 = vmul.f32 %v479, 0.6931472
  %v481 = vadd.f32 %v468, %v480
  %482 = vst.msk [vmem:[%s6] sm:$0xff] %vm461, %v458
  %v483 = vsub.f32 %v458, %v481
  %484 = vst.msk [vmem:[%s6 + $0x8] sm:$0xff] %vm461, %v483
  // Predicated region
  $region26: #{multicategorical_forward.1} parent=0 // pred_check
    _
  $region27: #{multicategorical_forward.1} parent=0 // pred_check_branch
    %486 = sbr.rel (0) target = $region29
  $region28: #{multicategorical_forward.1} parent=0 // pred_region
    _
  $region29: #{multicategorical_forward.1} parent=0 // pred_fallthru
    _
  // Predicated region
  $region30: #{multicategorical_forward.1} parent=0 // pred_check
    _
  $region31: #{multicategorical_forward.1} parent=0 // pred_check_branch
    %488 = sbr.rel (0) target = $region33
  $region32: #{multicategorical_forward.1} parent=0 // pred_region
    _
  $region33: #{multicategorical_forward.1} parent=0 // pred_fallthru
    _

</llo_original>
